<compile_context>
chip_gen: v7x
topology: tpu7x:2x2x1
jax: 0.10.0
libtpu: 0.0.40
codegen_flags: <defaults>
</compile_context>

<pallas_src>
from dataclasses import dataclass
from functools import partial
import math

import jax
import jax.numpy as jnp
from jax.experimental import pallas as pl
from jax.experimental.pallas import tpu as pltpu


_TINY_BYTES = 256 * 1024          # below this, grid-step overhead dominates
_MIB = 1 << 20


def _prod(xs):
    r = 1
    for v in xs:
        r *= int(v)
    return r


def _round_up(x, m):
    return ((x + m - 1) // m) * m


def _round_down(x, m):
    return (x // m) * m


# ---------------------------------------------------------------------------
# Generation-aware sizing (v5e / v6e / v7x differ in physical VMEM, scoped
# VMEM default, HBM bandwidth and TensorCore count).
# ---------------------------------------------------------------------------

@dataclass(frozen=True)
class _ChipConfig:
    block_budget: int      # bytes per pipelined block (in-block == out-block
                           # size); double-buffered in+out residency ~= 4x this
    vmem_limit_bytes: int  # explicit scoped-VMEM limit passed to Mosaic
    min_steps: int         # grid steps needed to pipeline / feed all cores


_CHIP_CONFIG = None


def _chip_config() -> _ChipConfig:
    global _CHIP_CONFIG
    if _CHIP_CONFIG is not None:
        return _CHIP_CONFIG

    kind = ""
    try:
        kind = jax.devices()[0].device_kind.lower()
    except Exception:
        pass
    phys_vmem = None
    try:
        phys_vmem = int(getattr(pltpu.get_tpu_info(), "vmem_capacity_bytes", 0)) or None
    except Exception:
        phys_vmem = None

    if "v5 lite" in kind or "v5e" in kind or "v5lite" in kind:
        # v5e: 128 MiB physical but a 16 MiB scoped default and a single
        # vector-store slot -> keep blocks small, raise the limit modestly.
        budget, limit, cores = 3 * _MIB, 32 * _MIB, 1
    elif "v6" in kind:
        # v6e: 128 MiB physical, 32 MiB scoped default -> larger blocks cut
        # per-step and DMA-descriptor overhead at 1.3-1.4 TB/s HBM.
        budget, limit, cores = 7 * _MIB, 64 * _MIB, 1
    elif "v7" in kind or "7x" in kind:
        # v7x: only 64 MiB physical VMEM, 2 TensorCores, 3.2 TB/s HBM.  Cap
        # total residency (~4x block) well below physical VMEM.
        budget, limit, cores = 8 * _MIB, 48 * _MIB, 2
    elif "v4" in kind or "v5p" in kind or "v5" in kind:
        budget, limit, cores = 6 * _MIB, 64 * _MIB, 2   # megacore chips
    else:
        budget, limit, cores = 3 * _MIB, 32 * _MIB, 1   # unknown: conservative

    if phys_vmem:
        limit = min(limit, (3 * phys_vmem) // 4)
        budget = max(1 * _MIB, min(budget, limit // 5))

    # A DMA-bound transpose only needs ~3 steps in flight; give each
    # TensorCore at least two "parallel" steps so megacore splits evenly.
    min_steps = max(3, 2 * cores)
    _CHIP_CONFIG = _ChipConfig(budget, limit, min_steps)
    return _CHIP_CONFIG


# ---------------------------------------------------------------------------
# Permutation coalescing.
# ---------------------------------------------------------------------------

def _coalesce(shape, perm):
    """Merge runs of input axes that stay adjacent & in order under `perm`.

    Returns (coalesced_input_shape, coalesced_perm).  Reshaping the input to
    the coalesced shape (and the permuted result back to the original output
    shape) only regroups adjacent axes, so both reshapes are free.
    """
    runs = [[perm[0]]]
    for p in perm[1:]:
        if p == runs[-1][-1] + 1:
            runs[-1].append(p)
        else:
            runs.append([p])
    input_order = sorted(range(len(runs)), key=lambda r: runs[r][0])
    new_shape = tuple(_prod(shape[ax] for ax in runs[r]) for r in input_order)
    pos = {r: i for i, r in enumerate(input_order)}
    new_perm = tuple(pos[r] for r in range(len(runs)))
    return new_shape, new_perm


# ---------------------------------------------------------------------------
# Tile selection.
# ---------------------------------------------------------------------------

def _pick_tile(dim, kept_elems, itemsize, other_steps, budget, min_steps):
    """Tile length along the larger transposed axis.

    Multiple of 128 (lane dim on one side; also a multiple of every sub-32-bit
    sublane-packing factor on the other) unless it covers the full axis.
    Bounded by the per-block VMEM budget; only shrunk further when that
    actually buys pipelining / core parallelism, and never below 512.
    """
    max_t = budget // max(1, kept_elems * itemsize)
    t = dim if max_t >= dim else max(128, _round_down(max_t, 128))
    if t > 512 and other_steps * pl.cdiv(dim, t) < min_steps:
        want_nt = pl.cdiv(min_steps, max(1, other_steps))
        t = min(t, max(512, _round_up(pl.cdiv(dim, want_nt), 128)))
    return min(t, dim)


# ---------------------------------------------------------------------------
# Kernel bodies.
# ---------------------------------------------------------------------------

def _swap_last2_kernel(x_ref, o_ref):
    # One clean 2-D XLU transpose per tile: (ta, tb) -> (tb, ta).
    o_ref[0] = x_ref[0].T


def _swap_last2_flat_kernel(x_ref, o_ref):
    # Lane-dense variant: transpose (a, tb) -> (tb, a) and store it flattened
    # into a (1, 1, tb*a) block.  The flattened block is the same contiguous
    # slab of the output in HBM, but tb*a is a multiple of 128, so stores are
    # unmasked full-lane vst and the write-back DMA is one contiguous segment
    # even when `a` (the kept channel dim, e.g. 96) is < 128.
    a, tb = x_ref.shape[1], x_ref.shape[2]
    o_ref[...] = x_ref[0].T.reshape(1, 1, tb * a)


def _slab_permute_kernel(rest_perm, x_ref, o_ref):
    # General fallback: transpose one leading-axis slab at a time.
    o_ref[0] = jnp.transpose(x_ref[0], rest_perm)


def _whole_permute_kernel(perm, x_ref, o_ref):
    # Tiny-input / residual fallback: whole array resident in VMEM.
    o_ref[...] = jnp.transpose(x_ref[...], perm)


# ---------------------------------------------------------------------------
# Feature probe for the flattened lane-dense output variant.
# ---------------------------------------------------------------------------

_FLAT_PROBE_CACHE = {}


def _flat_out_supported(a, tb, dtype):
    """One-time probe: does the flattened-store kernel lower and produce
    correct results for this (kept_dim, tile, dtype)?  The in-kernel
    (tb, a) -> (tb*a,) flatten relies on Mosaic shape-cast / relayout support
    that varies with shape and toolchain, so compile a single-block instance
    and check it numerically before trusting it for the real call."""
    key = (int(a), int(tb), str(dtype))
    hit = _FLAT_PROBE_CACHE.get(key)
    if hit is not None:
        return hit
    ok = False
    try:
        vals = (jnp.arange(a * tb) % 199).astype(dtype).reshape(1, a, tb)
        y = pl.pallas_call(
            _swap_last2_flat_kernel,
            out_shape=jax.ShapeDtypeStruct((1, 1, tb * a), dtype),
            grid=(1, 1),
            in_specs=[pl.BlockSpec((1, a, tb), lambda i, j: (i, 0, j))],
            out_specs=pl.BlockSpec((1, 1, tb * a), lambda i, j: (i, 0, j)),
        )(vals)
        y = jax.block_until_ready(y)
        ref = jnp.transpose(vals[0]).reshape(1, 1, tb * a)
        ok = bool(jnp.array_equal(y, ref))
    except Exception:
        ok = False
    _FLAT_PROBE_CACHE[key] = ok
    return ok


# ---------------------------------------------------------------------------
# Tiled (batched) last-two-axes swap: the VMamba fast path.
# ---------------------------------------------------------------------------

def _tiled_swap_last2(x3: jax.Array, cfg: _ChipConfig) -> jax.Array:
    """(N, A, B) -> (N, B, A), gridded over batch and tiles of the axes."""
    n, a, b = x3.shape
    itemsize = x3.dtype.itemsize
    nbytes = x3.size * itemsize
    cost = pl.CostEstimate(flops=0, transcendentals=0, bytes_accessed=2 * nbytes)

    # Keep the smaller transposed axis whole when it fits (one DMA side then
    # always moves full contiguous rows) and tile the larger one; if even a
    # 128-wide strip of the larger axis next to the whole smaller axis blows
    # the block budget, tile BOTH axes so residency stays bounded on every
    # generation (mandatory on v7x's 64 MiB VMEM; keeps v5e's scoped default).
    small, large = (a, b) if a <= b else (b, a)
    if small * 128 * itemsize <= cfg.block_budget:
        t_small = small
        t_large = _pick_tile(large, small, itemsize, n,
                             cfg.block_budget, cfg.min_steps)
    else:
        side = max(128, _round_down(int(math.isqrt(cfg.block_budget // itemsize)), 128))
        t_small, t_large = min(small, side), min(large, side)
    ta, tb = (t_small, t_large) if a <= b else (t_large, t_small)

    # Lane-dense flattened-output variant: output last dim `a` covered whole
    # but not a multiple of 128 (VMamba: C = 96, 192).  Feature-probed.
    use_flat = (ta == a and a % 128 != 0
                and (tb % 128 == 0 or tb == b)
                and _flat_out_supported(a, tb, x3.dtype))
    if use_flat:
        grid = (n, pl.cdiv(b, tb))
        y = pl.pallas_call(
            _swap_last2_flat_kernel,
            out_shape=jax.ShapeDtypeStruct((n, 1, b * a), x3.dtype),
            grid=grid,
            in_specs=[pl.BlockSpec((1, a, tb), lambda i, j: (i, 0, j))],
            out_specs=pl.BlockSpec((1, 1, tb * a), lambda i, j: (i, 0, j)),
            compiler_params=pltpu.CompilerParams(
                dimension_semantics=("parallel", "parallel"),
                vmem_limit_bytes=cfg.vmem_limit_bytes),
            cost_estimate=cost,
        )(x3)
        return y.reshape((n, b, a))

    # Plain tiled transpose.  Output blocks walk the output lane-sequentially
    # (last grid axis fastest); all axes "parallel" so megacore chips split
    # the work across TensorCores.
    # TODO(synk): for very small blocks a deeper pipeline
    # (pipeline_mode=pl.Buffered(3) on the input spec) can hide DMA jitter.
    grid = (n, pl.cdiv(b, tb), pl.cdiv(a, ta))
    return pl.pallas_call(
        _swap_last2_kernel,
        out_shape=jax.ShapeDtypeStruct((n, b, a), x3.dtype),
        grid=grid,
        in_specs=[pl.BlockSpec((1, ta, tb), lambda i, jb, ja: (i, ja, jb))],
        out_specs=pl.BlockSpec((1, tb, ta), lambda i, jb, ja: (i, jb, ja)),
        compiler_params=pltpu.CompilerParams(
            dimension_semantics=("parallel", "parallel", "parallel"),
            vmem_limit_bytes=cfg.vmem_limit_bytes),
        cost_estimate=cost,
    )(x3)


# ---------------------------------------------------------------------------
# Public entry point.
# ---------------------------------------------------------------------------

def permute(x: jax.Array, perm) -> jax.Array:
    perm = tuple(int(p) for p in perm)
    assert sorted(perm) == list(range(x.ndim)), "invalid permutation"
    if perm == tuple(range(x.ndim)):
        return x  # identity; torch's permute would just be a view
    out_shape = tuple(x.shape[p] for p in perm)

    cfg = _chip_config()
    cshape, cperm = _coalesce(x.shape, perm)
    xc = x.reshape(cshape)                      # adjacent-axis regroup: free
    itemsize = x.dtype.itemsize
    nbytes = x.size * itemsize
    cost = pl.CostEstimate(flops=0, transcendentals=0, bytes_accessed=2 * nbytes)

    if nbytes >= _TINY_BYTES:
        # Fast path: the permutation reduces to swapping the last two axes of
        # a (batched) 3-D view.  Covers VMamba's (0,2,3,1) and (0,3,1,2).
        if cperm == (1, 0):
            y = _tiled_swap_last2(xc.reshape((1,) + cshape), cfg)
            return y.reshape(out_shape)
        if cperm == (0, 2, 1):
            return _tiled_swap_last2(xc, cfg).reshape(out_shape)

    cout_shape = tuple(cshape[p] for p in cperm)

    if nbytes >= _TINY_BYTES and len(cshape) >= 3 and cperm[0] == 0:
        # Gridded fallback for leading-axis-preserving permutes: transpose one
        # leading-axis slab per grid step, guarded so double-buffered in+out
        # slabs stay inside the per-block VMEM budget.
        slab_bytes = _prod(cshape[1:]) * itemsize
        if slab_bytes <= cfg.block_budget:
            n = cshape[0]
            nd = len(cshape)
            rest_perm = tuple(p - 1 for p in cperm[1:])
            y = pl.pallas_call(
                partial(_slab_permute_kernel, rest_perm),
                out_shape=jax.ShapeDtypeStruct(cout_shape, x.dtype),
                grid=(n,),
                in_specs=[pl.BlockSpec((1,) + cshape[1:],
                                       lambda i: (i,) + (0,) * (nd - 1))],
                out_specs=pl.BlockSpec((1,) + cout_shape[1:],
                                       lambda i: (i,) + (0,) * (nd - 1)),
                compiler_params=pltpu.CompilerParams(
                    dimension_semantics=("parallel",),
                    vmem_limit_bytes=cfg.vmem_limit_bytes),
                cost_estimate=cost,
            )(xc)
            return y.reshape(out_shape)
        # TODO(synk): large non-VMamba slabs need a second tiling level
        # (pltpu.emit_pipeline inside the slab, or successive last-two-axis
        # swaps); fall through to the guarded whole-array / XLA path instead.

    if 2 * nbytes + _MIB <= cfg.vmem_limit_bytes:
        # Tiny inputs (grid-step overhead would dominate) and small leftover
        # permutations: whole array resident in VMEM, single invocation.
        y = pl.pallas_call(
            partial(_whole_permute_kernel, cperm),
            out_shape=jax.ShapeDtypeStruct(cout_shape, x.dtype),
            in_specs=[pl.BlockSpec(memory_space=pltpu.MemorySpace.VMEM)],
            out_specs=pl.BlockSpec(memory_space=pltpu.MemorySpace.VMEM),
            compiler_params=pltpu.CompilerParams(
                vmem_limit_bytes=cfg.vmem_limit_bytes),
            cost_estimate=cost,
        )(xc)
        return y.reshape(out_shape)

    # TODO(synk): permutations that neither coalesce to a last-two-axes swap
    # nor fit the guarded slab / whole-array kernels (never produced by
    # VMamba) would need an extra tiling level; use XLA's transpose rather
    # than risking a scoped-VMEM overflow.
    return jnp.transpose(x, perm)


class Permute:
    """JAX/Pallas analogue of the PyTorch Permute nn.Module."""

    def __init__(self, *args):
        self.args = tuple(args)

    def __call__(self, x):
        return permute(x, self.args)


if __name__ == "__main__":
    root = jax.random.PRNGKey(0)
    k0, k1, k2 = jax.random.split(root, 3)

    # 1) Tiny NCHW input: exercises the single-invocation whole-array path.
    x = jax.random.normal(k0, (2, 4, 16, 16), dtype=jnp.float32)
    out = jax.block_until_ready(Permute(0, 2, 3, 1)(x))        # NCHW -> NHWC
    assert out.shape == (2, 16, 16, 4), out.shape
    assert out.dtype == x.dtype
    assert jnp.array_equal(out, jnp.transpose(x, (0, 2, 3, 1))), "tiny mismatch"
    back = jax.block_until_ready(Permute(0, 3, 1, 2)(out))      # NHWC -> NCHW
    assert jnp.array_equal(back, x), "tiny round-trip mismatch"

    # 2) VMamba stage-1-like activation (C = 96 < 128, HW = 3136): exercises
    #    the tiled fast path in both directions, the lane-dense flattened
    #    output variant (when supported) and ragged edge tiles.
    xb = jax.random.normal(k1, (2, 96, 56, 56), dtype=jnp.float32)
    outb = jax.block_until_ready(Permute(0, 2, 3, 1)(xb))
    assert outb.shape == (2, 56, 56, 96), outb.shape
    assert jnp.array_equal(outb, jnp.transpose(xb, (0, 2, 3, 1))), "tiled mismatch"
    backb = jax.block_until_ready(Permute(0, 3, 1, 2)(outb))
    assert jnp.array_equal(backb, xb), "tiled round-trip mismatch"

    # 3) bf16 activations (typical VMamba dtype): packed-sublane tiles.
    xc = jax.random.normal(k2, (2, 96, 32, 32), dtype=jnp.float32).astype(jnp.bfloat16)
    outc = jax.block_until_ready(Permute(0, 2, 3, 1)(xc))
    assert outc.shape == (2, 32, 32, 96), outc.shape
    assert jnp.array_equal(outc, jnp.transpose(xc, (0, 2, 3, 1))), "bf16 mismatch"

    print("KERNEL_OK")
</pallas_src>

<mosaic_0001>
module attributes {stable_mosaic.version = 11 : i64} {
  func.func @_whole_permute_kernel(%arg0: memref<2x4x256xf32, #tpu.memory_space<vmem>>, %arg1: memref<2x256x4xf32, #tpu.memory_space<vmem>>) attributes {dimension_semantics = [], scalar_prefetch = 0 : i64, scratch_operands = 0 : i64, tpu.core_type = #tpu.core_type<tc>} {
    %c0 = arith.constant 0 : index
    %c0_0 = arith.constant 0 : index
    %c0_1 = arith.constant 0 : index
    %0 = vector.load %arg0[%c0, %c0_0, %c0_1] : memref<2x4x256xf32, #tpu.memory_space<vmem>>, vector<2x4x256xf32>
    %1 = tpu.transpose %0, [0, 2, 1] : vector<2x4x256xf32> -> vector<2x256x4xf32>
    %c0_2 = arith.constant 0 : index
    %c0_3 = arith.constant 0 : index
    %c0_4 = arith.constant 0 : index
    %2 = vector.load %arg1[%c0_2, %c0_3, %c0_4] : memref<2x256x4xf32, #tpu.memory_space<vmem>>, vector<2x256x4xf32>
    tpu.vector_store %arg1[%c0_2, %c0_3, %c0_4], %1 {strides = array<i32>} : memref<2x256x4xf32, #tpu.memory_space<vmem>>, vector<2x256x4xf32>,
    return
  }
}

</mosaic_0001>

<llo_original>
// kernel: tpu_custom_call.1
$region0: #{tpu_custom_call.1}
  #allocation0 [shape = 'u32[]', space=smem, size = 0x4, offset = 0x4, fixed_abs, tag = 'smem constant byte address 0x4 - core index']
  #allocation1 [shape = 'u32[144,128]{1,0:T(1,128)}', space=vmem, size = 0x12000, scoped, tag = 'internal scratch']
  %s0 = inlined_call_operand.hbm [shape: f32[2,4,256], index: 0, kind: input, shape index: {}]
  %s1 = inlined_call_operand.vmem [shape: f32[2,256,4], index: 1, kind: output, shape index: {}]
  %s2 = sld [smem:[#allocation0]]
  $region18: #{tpu_custom_call.1} parent=0
    _
  %s4 = ssub.s32 1, %s2
  %s5 = scalar_select 0, %s4, %s2
  $region1: #{tpu_custom_call.1} parent=0
    #allocation2 [shape = 'u8[8192]{0}', space=vmem, size = 0x2000, scoped, tag = 'input window, operand 0, single buffered']
    #allocation3 [shape = 's32[1]{0}', space=sflag, size = 0x4, scoped, tag = 'scoped memory for tpu_custom_call.1']
    %6 = vsyncpa [#allocation3], 0
    // Predicated region
    $region2: #{tpu_custom_call.1} parent=1 // pred_check
      _
    $region3: #{tpu_custom_call.1} parent=1 // pred_check_branch
      %8 = sbr.rel (0) target = $region5
    $region4: #{tpu_custom_call.1} parent=1 // pred_region
      %s10 = ssub.s32 256, 256
      %11 = vsyncadd [#allocation3], %s10
      %s12 = sshll.u32 [#allocation2], 4
      %s13 = int_to_ptr.vmem [resolvable:$true] %s12
      %18 = dma.hbm_to_vmem [thread:$0]  %s0, 256, %s13, [#allocation3], 128, 128, 8
    $region5: #{tpu_custom_call.1} parent=1 // pred_fallthru
      _
    // Predicated region
    $region6: #{tpu_custom_call.1} parent=1 // pred_check
      _
    $region7: #{tpu_custom_call.1} parent=1 // pred_check_branch
      %20 = sbr.rel (0) target = $region9
    $region8: #{tpu_custom_call.1} parent=1 // pred_region
      %21 = dma.done [#allocation3], 256
    $region9: #{tpu_custom_call.1} parent=1 // pred_fallthru
      _
    %v22 = vld [vmem:[#allocation2] sm:$0xff]
    %v23 = vld [vmem:[#allocation2 + $0x8] sm:$0xff]
    %v26 = vcombine.high %v22, %v22
    %v27 = vcombine.high %v23, %v23
    %30 = vxpose.xlu0.b32.start [1/16] %v22, 128
    %31 = vxpose.xlu0.b32.cont [2/16] 0.0, 128
    %32 = vxpose.xlu0.b32.cont [3/16] 0.0, 128
    %33 = vxpose.xlu0.b32.cont [4/16] 0.0, 128
    %34 = vxpose.xlu0.b32.cont [5/16] 0.0, 128
    %35 = vxpose.xlu0.b32.cont [6/16] 0.0, 128
    %36 = vxpose.xlu0.b32.cont [7/16] 0.0, 128
    %37 = vxpose.xlu0.b32.cont [8/16] 0.0, 128
    %38 = vxpose.xlu0.b32.cont [9/16] 0.0, 128
    %39 = vxpose.xlu0.b32.cont [10/16] 0.0, 128
    %40 = vxpose.xlu0.b32.cont [11/16] 0.0, 128
    %41 = vxpose.xlu0.b32.cont [12/16] 0.0, 128
    %42 = vxpose.xlu0.b32.cont [13/16] 0.0, 128
    %43 = vxpose.xlu0.b32.cont [14/16] 0.0, 128
    %44 = vxpose.xlu0.b32.cont [15/16] 0.0, 128
    %45 = vxpose.xlu0.b32.end [16/16] 0.0, 128
    %v46 = vpop.trf.xlu0
    %v47 = vpop.trf.xlu0
    %v48 = vpop.trf.xlu0
    %v49 = vpop.trf.xlu0
    %v50 = vpop.trf.xlu0
    %v51 = vpop.trf.xlu0
    %v52 = vpop.trf.xlu0
    %v53 = vpop.trf.xlu0
    %v54 = vpop.trf.xlu0
    %v55 = vpop.trf.xlu0
    %v56 = vpop.trf.xlu0
    %v57 = vpop.trf.xlu0
    %v58 = vpop.trf.xlu0
    %v59 = vpop.trf.xlu0
    %v60 = vpop.trf.xlu0
    %v61 = vpop.trf.xlu0
    %62 = vxpose.xlu0.b32.start [1/16] %v26, 128
    %63 = vxpose.xlu0.b32.cont [2/16] 0.0, 128
    %64 = vxpose.xlu0.b32.cont [3/16] 0.0, 128
    %65 = vxpose.xlu0.b32.cont [4/16] 0.0, 128
    %66 = vxpose.xlu0.b32.cont [5/16] 0.0, 128
    %67 = vxpose.xlu0.b32.cont [6/16] 0.0, 128
    %68 = vxpose.xlu0.b32.cont [7/16] 0.0, 128
    %69 = vxpose.xlu0.b32.cont [8/16] 0.0, 128
    %70 = vxpose.xlu0.b32.cont [9/16] 0.0, 128
    %71 = vxpose.xlu0.b32.cont [10/16] 0.0, 128
    %72 = vxpose.xlu0.b32.cont [11/16] 0.0, 128
    %73 = vxpose.xlu0.b32.cont [12/16] 0.0, 128
    %74 = vxpose.xlu0.b32.cont [13/16] 0.0, 128
    %75 = vxpose.xlu0.b32.cont [14/16] 0.0, 128
    %76 = vxpose.xlu0.b32.cont [15/16] 0.0, 128
    %77 = vxpose.xlu0.b32.end [16/16] 0.0, 128
    %v78 = vpop.trf.xlu0
    %v79 = vpop.trf.xlu0
    %v80 = vpop.trf.xlu0
    %v81 = vpop.trf.xlu0
    %v82 = vpop.trf.xlu0
    %v83 = vpop.trf.xlu0
    %v84 = vpop.trf.xlu0
    %v85 = vpop.trf.xlu0
    %v86 = vpop.trf.xlu0
    %v87 = vpop.trf.xlu0
    %v88 = vpop.trf.xlu0
    %v89 = vpop.trf.xlu0
    %v90 = vpop.trf.xlu0
    %v91 = vpop.trf.xlu0
    %v92 = vpop.trf.xlu0
    %v93 = vpop.trf.xlu0
    %94 = vxpose.xlu0.b32.start [1/16] %v23, 128
    %95 = vxpose.xlu0.b32.cont [2/16] 0.0, 128
    %96 = vxpose.xlu0.b32.cont [3/16] 0.0, 128
    %97 = vxpose.xlu0.b32.cont [4/16] 0.0, 128
    %98 = vxpose.xlu0.b32.cont [5/16] 0.0, 128
    %99 = vxpose.xlu0.b32.cont [6/16] 0.0, 128
    %100 = vxpose.xlu0.b32.cont [7/16] 0.0, 128
    %101 = vxpose.xlu0.b32.cont [8/16] 0.0, 128
    %102 = vxpose.xlu0.b32.cont [9/16] 0.0, 128
    %103 = vxpose.xlu0.b32.cont [10/16] 0.0, 128
    %104 = vxpose.xlu0.b32.cont [11/16] 0.0, 128
    %105 = vxpose.xlu0.b32.cont [12/16] 0.0, 128
    %106 = vxpose.xlu0.b32.cont [13/16] 0.0, 128
    %107 = vxpose.xlu0.b32.cont [14/16] 0.0, 128
    %108 = vxpose.xlu0.b32.cont [15/16] 0.0, 128
    %109 = vxpose.xlu0.b32.end [16/16] 0.0, 128
    %v110 = vpop.trf.xlu0
    %v111 = vpop.trf.xlu0
    %v112 = vpop.trf.xlu0
    %v113 = vpop.trf.xlu0
    %v114 = vpop.trf.xlu0
    %v115 = vpop.trf.xlu0
    %v116 = vpop.trf.xlu0
    %v117 = vpop.trf.xlu0
    %v118 = vpop.trf.xlu0
    %v119 = vpop.trf.xlu0
    %v120 = vpop.trf.xlu0
    %v121 = vpop.trf.xlu0
    %v122 = vpop.trf.xlu0
    %v123 = vpop.trf.xlu0
    %v124 = vpop.trf.xlu0
    %v125 = vpop.trf.xlu0
    %126 = vxpose.xlu0.b32.start [1/16] %v27, 128
    %127 = vxpose.xlu0.b32.cont [2/16] 0.0, 128
    %128 = vxpose.xlu0.b32.cont [3/16] 0.0, 128
    %129 = vxpose.xlu0.b32.cont [4/16] 0.0, 128
    %130 = vxpose.xlu0.b32.cont [5/16] 0.0, 128
    %131 = vxpose.xlu0.b32.cont [6/16] 0.0, 128
    %132 = vxpose.xlu0.b32.cont [7/16] 0.0, 128
    %133 = vxpose.xlu0.b32.cont [8/16] 0.0, 128
    %134 = vxpose.xlu0.b32.cont [9/16] 0.0, 128
    %135 = vxpose.xlu0.b32.cont [10/16] 0.0, 128
    %136 = vxpose.xlu0.b32.cont [11/16] 0.0, 128
    %137 = vxpose.xlu0.b32.cont [12/16] 0.0, 128
    %138 = vxpose.xlu0.b32.cont [13/16] 0.0, 128
    %139 = vxpose.xlu0.b32.cont [14/16] 0.0, 128
    %140 = vxpose.xlu0.b32.cont [15/16] 0.0, 128
    %141 = vxpose.xlu0.b32.end [16/16] 0.0, 128
    %v142 = vpop.trf.xlu0
    %v143 = vpop.trf.xlu0
    %v144 = vpop.trf.xlu0
    %v145 = vpop.trf.xlu0
    %v146 = vpop.trf.xlu0
    %v147 = vpop.trf.xlu0
    %v148 = vpop.trf.xlu0
    %v149 = vpop.trf.xlu0
    %v150 = vpop.trf.xlu0
    %v151 = vpop.trf.xlu0
    %v152 = vpop.trf.xlu0
    %v153 = vpop.trf.xlu0
    %v154 = vpop.trf.xlu0
    %v155 = vpop.trf.xlu0
    %v156 = vpop.trf.xlu0
    %v157 = vpop.trf.xlu0
    %vm158 = vcmask 31744
    %159 = vst.msk [vmem:[%s1] sm:$0xff] %vm158, %v46
    %160 = vst.msk [vmem:[%s1 + $0x8] sm:$0xff] %vm158, %v47
    %161 = vst.msk [vmem:[%s1 + $0x10] sm:$0xff] %vm158, %v48
    %162 = vst.msk [vmem:[%s1 + $0x18] sm:$0xff] %vm158, %v49
    %163 = vst.msk [vmem:[%s1 + $0x20] sm:$0xff] %vm158, %v50
    %164 = vst.msk [vmem:[%s1 + $0x28] sm:$0xff] %vm158, %v51
    %165 = vst.msk [vmem:[%s1 + $0x30] sm:$0xff] %vm158, %v52
    %166 = vst.msk [vmem:[%s1 + $0x38] sm:$0xff] %vm158, %v53
    %167 = vst.msk [vmem:[%s1 + $0x40] sm:$0xff] %vm158, %v54
    %168 = vst.msk [vmem:[%s1 + $0x48] sm:$0xff] %vm158, %v55
    %169 = vst.msk [vmem:[%s1 + $0x50] sm:$0xff] %vm158, %v56
    %170 = vst.msk [vmem:[%s1 + $0x58] sm:$0xff] %vm158, %v57
    %171 = vst.msk [vmem:[%s1 + $0x60] sm:$0xff] %vm158, %v58
    %172 = vst.msk [vmem:[%s1 + $0x68] sm:$0xff] %vm158, %v59
    %173 = vst.msk [vmem:[%s1 + $0x70] sm:$0xff] %vm158, %v60
    %174 = vst.msk [vmem:[%s1 + $0x78] sm:$0xff] %vm158, %v61
    %175 = vst.msk [vmem:[%s1 + $0x80] sm:$0xff] %vm158, %v78
    %176 = vst.msk [vmem:[%s1 + $0x88] sm:$0xff] %vm158, %v79
    %177 = vst.msk [vmem:[%s1 + $0x90] sm:$0xff] %vm158, %v80
    %178 = vst.msk [vmem:[%s1 + $0x98] sm:$0xff] %vm158, %v81
    %179 = vst.msk [vmem:[%s1 + $0xa0] sm:$0xff] %vm158, %v82
    %180 = vst.msk [vmem:[%s1 + $0xa8] sm:$0xff] %vm158, %v83
    %181 = vst.msk [vmem:[%s1 + $0xb0] sm:$0xff] %vm158, %v84
    %182 = vst.msk [vmem:[%s1 + $0xb8] sm:$0xff] %vm158, %v85
    %183 = vst.msk [vmem:[%s1 + $0xc0] sm:$0xff] %vm158, %v86
    %184 = vst.msk [vmem:[%s1 + $0xc8] sm:$0xff] %vm158, %v87
    %185 = vst.msk [vmem:[%s1 + $0xd0] sm:$0xff] %vm158, %v88
    %186 = vst.msk [vmem:[%s1 + $0xd8] sm:$0xff] %vm158, %v89
    %187 = vst.msk [vmem:[%s1 + $0xe0] sm:$0xff] %vm158, %v90
    %188 = vst.msk [vmem:[%s1 + $0xe8] sm:$0xff] %vm158, %v91
    %189 = vst.msk [vmem:[%s1 + $0xf0] sm:$0xff] %vm158, %v92
    %190 = vst.msk [vmem:[%s1 + $0xf8] sm:$0xff] %vm158, %v93
    %191 = vst.msk [vmem:[%s1 + $0x100] sm:$0xff] %vm158, %v110
    %192 = vst.msk [vmem:[%s1 + $0x108] sm:$0xff] %vm158, %v111
    %193 = vst.msk [vmem:[%s1 + $0x110] sm:$0xff] %vm158, %v112
    %194 = vst.msk [vmem:[%s1 + $0x118] sm:$0xff] %vm158, %v113
    %195 = vst.msk [vmem:[%s1 + $0x120] sm:$0xff] %vm158, %v114
    %196 = vst.msk [vmem:[%s1 + $0x128] sm:$0xff] %vm158, %v115
    %197 = vst.msk [vmem:[%s1 + $0x130] sm:$0xff] %vm158, %v116
    %198 = vst.msk [vmem:[%s1 + $0x138] sm:$0xff] %vm158, %v117
    %199 = vst.msk [vmem:[%s1 + $0x140] sm:$0xff] %vm158, %v118
    %200 = vst.msk [vmem:[%s1 + $0x148] sm:$0xff] %vm158, %v119
    %201 = vst.msk [vmem:[%s1 + $0x150] sm:$0xff] %vm158, %v120
    %202 = vst.msk [vmem:[%s1 + $0x158] sm:$0xff] %vm158, %v121
    %203 = vst.msk [vmem:[%s1 + $0x160] sm:$0xff] %vm158, %v122
    %204 = vst.msk [vmem:[%s1 + $0x168] sm:$0xff] %vm158, %v123
    %205 = vst.msk [vmem:[%s1 + $0x170] sm:$0xff] %vm158, %v124
    %206 = vst.msk [vmem:[%s1 + $0x178] sm:$0xff] %vm158, %v125
    %207 = vst.msk [vmem:[%s1 + $0x180] sm:$0xff] %vm158, %v142
    %208 = vst.msk [vmem:[%s1 + $0x188] sm:$0xff] %vm158, %v143
    %209 = vst.msk [vmem:[%s1 + $0x190] sm:$0xff] %vm158, %v144
    %210 = vst.msk [vmem:[%s1 + $0x198] sm:$0xff] %vm158, %v145
    %211 = vst.msk [vmem:[%s1 + $0x1a0] sm:$0xff] %vm158, %v146
    %212 = vst.msk [vmem:[%s1 + $0x1a8] sm:$0xff] %vm158, %v147
    %213 = vst.msk [vmem:[%s1 + $0x1b0] sm:$0xff] %vm158, %v148
    %214 = vst.msk [vmem:[%s1 + $0x1b8] sm:$0xff] %vm158, %v149
    %215 = vst.msk [vmem:[%s1 + $0x1c0] sm:$0xff] %vm158, %v150
    %216 = vst.msk [vmem:[%s1 + $0x1c8] sm:$0xff] %vm158, %v151
    %217 = vst.msk [vmem:[%s1 + $0x1d0] sm:$0xff] %vm158, %v152
    %218 = vst.msk [vmem:[%s1 + $0x1d8] sm:$0xff] %vm158, %v153
    %219 = vst.msk [vmem:[%s1 + $0x1e0] sm:$0xff] %vm158, %v154
    %220 = vst.msk [vmem:[%s1 + $0x1e8] sm:$0xff] %vm158, %v155
    %221 = vst.msk [vmem:[%s1 + $0x1f0] sm:$0xff] %vm158, %v156
    %222 = vst.msk [vmem:[%s1 + $0x1f8] sm:$0xff] %vm158, %v157
    // Predicated region
    $region10: #{tpu_custom_call.1} parent=1 // pred_check
      _
    $region11: #{tpu_custom_call.1} parent=1 // pred_check_branch
      %224 = sbr.rel (0) target = $region13
    $region12: #{tpu_custom_call.1} parent=1 // pred_region
      _
    $region13: #{tpu_custom_call.1} parent=1 // pred_fallthru
      _
    // Predicated region
    $region14: #{tpu_custom_call.1} parent=1 // pred_check
      _
    $region15: #{tpu_custom_call.1} parent=1 // pred_check_branch
      %226 = sbr.rel (0) target = $region17
    $region16: #{tpu_custom_call.1} parent=1 // pred_region
      _
    $region17: #{tpu_custom_call.1} parent=1 // pred_fallthru
      _
    %227 = vsyncpa [#allocation3], 1

</llo_original>
